<compile_context>
chip_gen: v7x
topology: tpu7x:2x2x1
jax: 0.10.0
libtpu: 0.0.40
codegen_flags: <defaults>
</compile_context>

<pallas_src>
import jax
import jax.numpy as jnp
from jax.experimental import pallas as pl
from jax.experimental.pallas import tpu as pltpu

INPUT_DIM = 8      # len(features)
HIDDEN_DIM = 50
NUM_LAYERS = 2
OUTPUT_DIM = 1

GATE_LANES = 128   # each gate occupies its own 128-lane slab (H zero-padded, exact)
X_LANES = 16       # 8 features + bias lane (lane 8 == 1.0) + 7 zero pad
BIAS_LANE = INPUT_DIM
OUT_LANES = 8      # narrow f32 output block; column 0 is the prediction
MAX_TILE_B = 2048  # per-tile VMEM at 2048 rows is tiny on every TPU generation


def _device_kind():
    try:
        return jax.devices()[0].device_kind.lower()
    except Exception:
        return ""


def _default_act_dtype():
    # bf16 VPU/EUP exist on v6e/v7x; on v5e and older keep activation math in f32.
    kind = _device_kind()
    if ("v6" in kind) or ("v7" in kind):
        return jnp.bfloat16
    return jnp.float32


def _choose_tile_b(batch):
    kind = _device_kind()
    b8 = -(-batch // 8) * 8
    if b8 <= MAX_TILE_B:
        tile = b8
        # v7x has 2 TensorCores per chip: keep >= 2 tiles when the batch is big enough
        # to be worth sharding across them.
        if ("v7" in kind) and b8 >= 1024:
            tile = -(-(b8 // 2) // 8) * 8
        return max(tile, 8)
    return MAX_TILE_B


def _make_kernel(act_dtype):
    def gru_model_kernel(x_ref, w0_ref, w1_ref, wfc_ref, b_ref, out_ref):
        """One batch tile of the full forward pass.

        x_ref  : (tile_b, 16)  bf16  features in lanes 0..7, lane 8 == 1.0 (bias lane)
        w0_ref : (16, 384)     bf16  layer-0 W_ih^T per-gate slabs; row 8 = folded biases
        w1_ref : (128, 384)    bf16  layer-1 W_ih^T per-gate slabs (K zero-padded, exact)
        wfc_ref: (128, 8)      bf16  fc weight in column 0, rest zero
        b_ref  : (8, 384)      f32   row0 = L0 b_hh_n | row1 = L1 main bias
                                     row2 = L1 b_hh_n | row3 lane0 = fc bias
        out_ref: (tile_b, 8)   f32   column 0 holds the prediction
        """
        G = GATE_LANES
        x = x_ref[...]                               # (B, 16) bf16
        b32 = b_ref[...]                             # (8, 384) f32
        b = b32.astype(act_dtype)

        def gates(g, b_hh_n):
            # Whole-vreg gate slices (gates live at lane offsets 0 / 128 / 256).
            r = jax.nn.sigmoid(g[:, 0:G])
            z = jax.nn.sigmoid(g[:, G:2 * G])
            n = jnp.tanh(g[:, 2 * G:3 * G] + r * b_hh_n)
            # h_prev == 0  =>  z * h_prev == 0 ; padded hidden lanes stay exactly 0.
            return ((1.0 - z) * n).astype(jnp.bfloat16)

        # ---- layer 0: main biases folded into the MXU via the constant-1 input lane ----
        g0 = jnp.dot(x, w0_ref[...], preferred_element_type=jnp.float32).astype(act_dtype)
        h1 = gates(g0, b[0:1, 0:G])                  # (B, 128) bf16

        # ---- layer 1 ----
        g1 = jnp.dot(h1, w1_ref[...], preferred_element_type=jnp.float32).astype(act_dtype)
        h2 = gates(g1 + b[1:2, :], b[2:3, 0:G])      # (B, 128) bf16

        # ---- fc head: (B,128) x (128,8); only column 0 / rows < H are nonzero ----
        out = jnp.dot(h2, wfc_ref[...], preferred_element_type=jnp.float32)
        out_ref[...] = out + b32[3:4, 0:OUT_LANES]   # f32 store; column 0 is the answer

    return gru_model_kernel


def gru_model_forward(x, packed, *, tile_b=None, act_dtype=None):
    """x: (B, INPUT_DIM) f32. Returns (B, OUTPUT_DIM) f32."""
    B = x.shape[0]
    if act_dtype is None:
        act_dtype = _default_act_dtype()
    if tile_b is None:
        tile_b = _choose_tile_b(B)
    tile_b = max(8, (tile_b // 8) * 8)
    B_pad = -(-B // tile_b) * tile_b
    n_tiles = B_pad // tile_b

    x_pad = jnp.zeros((B_pad, X_LANES), jnp.bfloat16)
    x_pad = x_pad.at[:B, :INPUT_DIM].set(x.astype(jnp.bfloat16))
    x_pad = x_pad.at[:B, BIAS_LANE].set(1.0)         # bias lane drives the folded biases

    out = pl.pallas_call(
        _make_kernel(act_dtype),
        out_shape=jax.ShapeDtypeStruct((B_pad, OUT_LANES), jnp.float32),
        grid_spec=pltpu.PrefetchScalarGridSpec(
            num_scalar_prefetch=0,
            grid=(n_tiles,),
            in_specs=[
                pl.BlockSpec((tile_b, X_LANES), lambda i: (i, 0)),
                pl.BlockSpec((X_LANES, 3 * GATE_LANES), lambda i: (0, 0)),
                pl.BlockSpec((GATE_LANES, 3 * GATE_LANES), lambda i: (0, 0)),
                pl.BlockSpec((GATE_LANES, OUT_LANES), lambda i: (0, 0)),
                pl.BlockSpec((8, 3 * GATE_LANES), lambda i: (0, 0)),
            ],
            out_specs=pl.BlockSpec((tile_b, OUT_LANES), lambda i: (i, 0)),
        ),
        compiler_params=pltpu.CompilerParams(
            dimension_semantics=("parallel",)),
    )(x_pad, packed["w0"], packed["w1"], packed["wfc"], packed["b"])

    return out[:B, :OUTPUT_DIM]


# ----------------------------------------------------------------------------
# Parameter construction (PyTorch layout) and packing into the kernel slabs.
# ----------------------------------------------------------------------------

def init_params(key):
    """PyTorch-shaped params: uniform(-1/sqrt(H), 1/sqrt(H)). Gate order: r | z | n."""
    k = 1.0 / jnp.sqrt(jnp.float32(HIDDEN_DIM))
    keys = jax.random.split(key, 10)

    def u(kk, shape):
        return jax.random.uniform(kk, shape, jnp.float32, minval=-k, maxval=k)

    return {
        "w_ih0": u(keys[0], (3 * HIDDEN_DIM, INPUT_DIM)),
        "w_hh0": u(keys[1], (3 * HIDDEN_DIM, HIDDEN_DIM)),
        "b_ih0": u(keys[2], (3 * HIDDEN_DIM,)),
        "b_hh0": u(keys[3], (3 * HIDDEN_DIM,)),
        "w_ih1": u(keys[4], (3 * HIDDEN_DIM, HIDDEN_DIM)),
        "w_hh1": u(keys[5], (3 * HIDDEN_DIM, HIDDEN_DIM)),
        "b_ih1": u(keys[6], (3 * HIDDEN_DIM,)),
        "b_hh1": u(keys[7], (3 * HIDDEN_DIM,)),
        "fc_w": u(keys[8], (OUTPUT_DIM, HIDDEN_DIM)),
        "fc_b": u(keys[9], (OUTPUT_DIM,)),
    }


def pack_params(p):
    """Repack PyTorch params into lane-aligned bf16 weight slabs + one f32 bias slab.

    All padded lanes / rows are zero; this is what keeps the 50->128 hidden padding and the
    K padding exact (padded hidden lanes compute to exactly 0 through both layers).
    """
    H, D, G = HIDDEN_DIM, INPUT_DIM, GATE_LANES
    w0 = jnp.zeros((X_LANES, 3 * G), jnp.float32)
    w1 = jnp.zeros((G, 3 * G), jnp.float32)
    wfc = jnp.zeros((G, OUT_LANES), jnp.float32)
    b = jnp.zeros((8, 3 * G), jnp.float32)

    def gate_rows(mat, g):
        return mat[g * H:(g + 1) * H, :]

    def gate_vec(vec, g):
        return vec[g * H:(g + 1) * H]

    for g in range(3):
        # layer 0: W_ih (3H, D) -> (D, H) into rows [0:D], lanes [g*G : g*G+H]
        w0 = w0.at[:D, g * G:g * G + H].set(gate_rows(p["w_ih0"], g).T)
        # layer 1: W_ih (3H, H) -> (H, H); K dim zero-padded to 128 (exact)
        w1 = w1.at[:H, g * G:g * G + H].set(gate_rows(p["w_ih1"], g).T)

    # Layer-0 main biases folded into the MXU via weight row BIAS_LANE (input lane 8 == 1):
    # r/z gates get b_ih + b_hh (h0 == 0), n gate gets only b_ih (b_hh_n is multiplied by r).
    for g in range(2):
        w0 = w0.at[BIAS_LANE, g * G:g * G + H].set(
            gate_vec(p["b_ih0"], g) + gate_vec(p["b_hh0"], g))
    w0 = w0.at[BIAS_LANE, 2 * G:2 * G + H].set(gate_vec(p["b_ih0"], 2))
    b = b.at[0, 0:H].set(gate_vec(p["b_hh0"], 2))          # layer-0 n-gate b_hh part

    # Layer-1 biases (kept as one VPU add in the kernel).
    for g in range(2):
        b = b.at[1, g * G:g * G + H].set(
            gate_vec(p["b_ih1"], g) + gate_vec(p["b_hh1"], g))
    b = b.at[1, 2 * G:2 * G + H].set(gate_vec(p["b_ih1"], 2))
    b = b.at[2, 0:H].set(gate_vec(p["b_hh1"], 2))           # layer-1 n-gate b_hh part

    # fc head: Linear(H, 1) into column 0; bias into row 3 lane 0.
    wfc = wfc.at[:H, 0:OUTPUT_DIM].set(p["fc_w"].T)
    b = b.at[3, 0:OUTPUT_DIM].set(p["fc_b"])

    return {
        "w0": w0.astype(jnp.bfloat16),
        "w1": w1.astype(jnp.bfloat16),
        "wfc": wfc.astype(jnp.bfloat16),
        "b": b,
    }


# ----------------------------------------------------------------------------
# Pure-JAX f32 reference of the original PyTorch forward (seq_len == 1, h0 == 0).
# ----------------------------------------------------------------------------

def _ref_gru_cell(x, h, w_ih, w_hh, b_ih, b_hh):
    H = HIDDEN_DIM
    gx = x @ w_ih.T + b_ih
    gh = h @ w_hh.T + b_hh
    r = jax.nn.sigmoid(gx[:, 0:H] + gh[:, 0:H])
    z = jax.nn.sigmoid(gx[:, H:2 * H] + gh[:, H:2 * H])
    n = jnp.tanh(gx[:, 2 * H:3 * H] + r * gh[:, 2 * H:3 * H])
    return (1.0 - z) * n + z * h


def reference_forward(x, p):
    B = x.shape[0]
    h0 = jnp.zeros((B, HIDDEN_DIM), jnp.float32)
    h1 = _ref_gru_cell(x, h0, p["w_ih0"], p["w_hh0"], p["b_ih0"], p["b_hh0"])
    h2 = _ref_gru_cell(h1, h0, p["w_ih1"], p["w_hh1"], p["b_ih1"], p["b_hh1"])
    return h2 @ p["fc_w"].T + p["fc_b"]


if __name__ == "__main__":
    key = jax.random.PRNGKey(0)
    kx, kp = jax.random.split(key)

    batch = 4
    x = jax.random.normal(kx, (batch, INPUT_DIM), jnp.float32)
    params = init_params(kp)
    packed = pack_params(params)

    out = gru_model_forward(x, packed)
    out = jax.block_until_ready(out)

    ref = reference_forward(x, params)
    assert out.shape == (batch, OUTPUT_DIM)
    # bf16 weights (and bf16 activation math on v6e/v7x) vs. pure-f32 reference -> loose tol.
    assert jnp.allclose(out, ref, atol=5e-2, rtol=5e-2), (out, ref)

    print("KERNEL_OK")
</pallas_src>

<mosaic_0001>
module attributes {stable_mosaic.version = 11 : i64} {
  func.func @gru_model_kernel(%arg0: i32, %arg1: memref<8x16xbf16, #tpu.memory_space<vmem>>, %arg2: memref<16x384xbf16, #tpu.memory_space<vmem>>, %arg3: memref<128x384xbf16, #tpu.memory_space<vmem>>, %arg4: memref<128x8xbf16, #tpu.memory_space<vmem>>, %arg5: memref<8x384xf32, #tpu.memory_space<vmem>>, %arg6: memref<8x8xf32, #tpu.memory_space<vmem>>) attributes {dimension_semantics = [#tpu.dimension_semantics<parallel>], iteration_bounds = array<i64: 1>, scalar_prefetch = 0 : i64, scratch_operands = 0 : i64, tpu.core_type = #tpu.core_type<tc>, window_params = [{transform_indices = @transform_0, window_bounds = array<i64: 8, 16>}, {pipeline_mode = #tpu.pipeline_mode<synchronous>, transform_indices = @transform_1, window_bounds = array<i64: 16, 384>}, {pipeline_mode = #tpu.pipeline_mode<synchronous>, transform_indices = @transform_2, window_bounds = array<i64: 128, 384>}, {pipeline_mode = #tpu.pipeline_mode<synchronous>, transform_indices = @transform_3, window_bounds = array<i64: 128, 8>}, {pipeline_mode = #tpu.pipeline_mode<synchronous>, transform_indices = @transform_4, window_bounds = array<i64: 8, 384>}, {transform_indices = @transform_5, window_bounds = array<i64: 8, 8>}]} {
    %c0 = arith.constant 0 : index
    %c0_0 = arith.constant 0 : index
    %0 = vector.load %arg1[%c0, %c0_0] : memref<8x16xbf16, #tpu.memory_space<vmem>>, vector<8x16xbf16>
    %c0_1 = arith.constant 0 : index
    %c0_2 = arith.constant 0 : index
    %1 = vector.load %arg5[%c0_1, %c0_2] : memref<8x384xf32, #tpu.memory_space<vmem>>, vector<8x384xf32>
    %c0_3 = arith.constant 0 : index
    %c0_4 = arith.constant 0 : index
    %2 = vector.load %arg2[%c0_3, %c0_4] : memref<16x384xbf16, #tpu.memory_space<vmem>>, vector<16x384xbf16>
    %cst = arith.constant dense<0.000000e+00> : vector<8x384xf32>
    %3 = tpu.matmul %0, %2, %cst {dimension_numbers = #tpu.dot_dimension_numbers<[1], [0], [0], [1], [0, 0, 1, 1], [], []>} : vector<8x16xbf16>, vector<16x384xbf16>, vector<8x384xf32> -> vector<8x384xf32>
    %4 = vector.extract_strided_slice %1 {offsets = [0, 0], sizes = [1, 128], strides = [1, 1]} : vector<8x384xf32> to vector<1x128xf32>
    %5 = vector.extract_strided_slice %3 {offsets = [0, 0], sizes = [8, 128], strides = [1, 1]} : vector<8x384xf32> to vector<8x128xf32>
    %6 = arith.negf %5 : vector<8x128xf32>
    %7 = math.exp %6 : vector<8x128xf32>
    %cst_5 = arith.constant 1.000000e+00 : f32
    %8 = vector.broadcast %cst_5 : f32 to vector<8x128xf32>
    %9 = arith.addf %8, %7 : vector<8x128xf32>
    %10 = arith.divf %8, %9 : vector<8x128xf32>
    %11 = vector.extract_strided_slice %3 {offsets = [0, 128], sizes = [8, 128], strides = [1, 1]} : vector<8x384xf32> to vector<8x128xf32>
    %12 = arith.negf %11 : vector<8x128xf32>
    %13 = math.exp %12 : vector<8x128xf32>
    %cst_6 = arith.constant 1.000000e+00 : f32
    %14 = vector.broadcast %cst_6 : f32 to vector<8x128xf32>
    %15 = arith.addf %14, %13 : vector<8x128xf32>
    %16 = arith.divf %14, %15 : vector<8x128xf32>
    %17 = vector.extract_strided_slice %3 {offsets = [0, 256], sizes = [8, 128], strides = [1, 1]} : vector<8x384xf32> to vector<8x128xf32>
    %18 = vector.broadcast %4 : vector<1x128xf32> to vector<8x128xf32>
    %19 = arith.mulf %10, %18 : vector<8x128xf32>
    %20 = arith.addf %17, %19 : vector<8x128xf32>
    %21 = math.tanh %20 : vector<8x128xf32>
    %cst_7 = arith.constant 1.000000e+00 : f32
    %22 = vector.broadcast %cst_7 : f32 to vector<8x128xf32>
    %23 = arith.subf %22, %16 : vector<8x128xf32>
    %24 = arith.mulf %23, %21 : vector<8x128xf32>
    %25 = arith.truncf %24 : vector<8x128xf32> to vector<8x128xbf16>
    %c0_8 = arith.constant 0 : index
    %c0_9 = arith.constant 0 : index
    %26 = vector.load %arg3[%c0_8, %c0_9] : memref<128x384xbf16, #tpu.memory_space<vmem>>, vector<128x384xbf16>
    %cst_10 = arith.constant dense<0.000000e+00> : vector<8x384xf32>
    %27 = tpu.matmul %25, %26, %cst_10 {dimension_numbers = #tpu.dot_dimension_numbers<[1], [0], [0], [1], [0, 0, 1, 1], [], []>} : vector<8x128xbf16>, vector<128x384xbf16>, vector<8x384xf32> -> vector<8x384xf32>
    %28 = vector.extract_strided_slice %1 {offsets = [1, 0], sizes = [1, 384], strides = [1, 1]} : vector<8x384xf32> to vector<1x384xf32>
    %29 = vector.broadcast %28 : vector<1x384xf32> to vector<8x384xf32>
    %30 = arith.addf %27, %29 : vector<8x384xf32>
    %31 = vector.extract_strided_slice %1 {offsets = [2, 0], sizes = [1, 128], strides = [1, 1]} : vector<8x384xf32> to vector<1x128xf32>
    %32 = vector.extract_strided_slice %30 {offsets = [0, 0], sizes = [8, 128], strides = [1, 1]} : vector<8x384xf32> to vector<8x128xf32>
    %33 = arith.negf %32 : vector<8x128xf32>
    %34 = math.exp %33 : vector<8x128xf32>
    %cst_11 = arith.constant 1.000000e+00 : f32
    %35 = vector.broadcast %cst_11 : f32 to vector<8x128xf32>
    %36 = arith.addf %35, %34 : vector<8x128xf32>
    %37 = arith.divf %35, %36 : vector<8x128xf32>
    %38 = vector.extract_strided_slice %30 {offsets = [0, 128], sizes = [8, 128], strides = [1, 1]} : vector<8x384xf32> to vector<8x128xf32>
    %39 = arith.negf %38 : vector<8x128xf32>
    %40 = math.exp %39 : vector<8x128xf32>
    %cst_12 = arith.constant 1.000000e+00 : f32
    %41 = vector.broadcast %cst_12 : f32 to vector<8x128xf32>
    %42 = arith.addf %41, %40 : vector<8x128xf32>
    %43 = arith.divf %41, %42 : vector<8x128xf32>
    %44 = vector.extract_strided_slice %30 {offsets = [0, 256], sizes = [8, 128], strides = [1, 1]} : vector<8x384xf32> to vector<8x128xf32>
    %45 = vector.broadcast %31 : vector<1x128xf32> to vector<8x128xf32>
    %46 = arith.mulf %37, %45 : vector<8x128xf32>
    %47 = arith.addf %44, %46 : vector<8x128xf32>
    %48 = math.tanh %47 : vector<8x128xf32>
    %cst_13 = arith.constant 1.000000e+00 : f32
    %49 = vector.broadcast %cst_13 : f32 to vector<8x128xf32>
    %50 = arith.subf %49, %43 : vector<8x128xf32>
    %51 = arith.mulf %50, %48 : vector<8x128xf32>
    %52 = arith.truncf %51 : vector<8x128xf32> to vector<8x128xbf16>
    %c0_14 = arith.constant 0 : index
    %c0_15 = arith.constant 0 : index
    %53 = vector.load %arg4[%c0_14, %c0_15] : memref<128x8xbf16, #tpu.memory_space<vmem>>, vector<128x8xbf16>
    %cst_16 = arith.constant dense<0.000000e+00> : vector<8x8xf32>
    %54 = tpu.matmul %52, %53, %cst_16 {dimension_numbers = #tpu.dot_dimension_numbers<[1], [0], [0], [1], [0, 0, 1, 1], [], []>} : vector<8x128xbf16>, vector<128x8xbf16>, vector<8x8xf32> -> vector<8x8xf32>
    %55 = vector.extract_strided_slice %1 {offsets = [3, 0], sizes = [1, 8], strides = [1, 1]} : vector<8x384xf32> to vector<1x8xf32>
    %56 = vector.broadcast %55 : vector<1x8xf32> to vector<8x8xf32>
    %57 = arith.addf %54, %56 : vector<8x8xf32>
    %c0_17 = arith.constant 0 : index
    %c0_18 = arith.constant 0 : index
    %58 = vector.load %arg6[%c0_17, %c0_18] : memref<8x8xf32, #tpu.memory_space<vmem>>, vector<8x8xf32>
    tpu.vector_store %arg6[%c0_17, %c0_18], %57 {strides = array<i32>} : memref<8x8xf32, #tpu.memory_space<vmem>>, vector<8x8xf32>,
    return
  }
  func.func @transform_0(%arg0: i32) -> (i32, i32) {
    %c0_i32 = arith.constant 0 : i32
    %c0_i32_0 = arith.constant 0 : i32
    return %arg0, %c0_i32 : i32, i32
  }
  func.func @transform_1(%arg0: i32) -> (i32, i32) {
    %c0_i32 = arith.constant 0 : i32
    %c0_i32_0 = arith.constant 0 : i32
    %c0_i32_1 = arith.constant 0 : i32
    return %c0_i32, %c0_i32_0 : i32, i32
  }
  func.func @transform_2(%arg0: i32) -> (i32, i32) {
    %c0_i32 = arith.constant 0 : i32
    %c0_i32_0 = arith.constant 0 : i32
    %c0_i32_1 = arith.constant 0 : i32
    return %c0_i32, %c0_i32_0 : i32, i32
  }
  func.func @transform_3(%arg0: i32) -> (i32, i32) {
    %c0_i32 = arith.constant 0 : i32
    %c0_i32_0 = arith.constant 0 : i32
    %c0_i32_1 = arith.constant 0 : i32
    return %c0_i32, %c0_i32_0 : i32, i32
  }
  func.func @transform_4(%arg0: i32) -> (i32, i32) {
    %c0_i32 = arith.constant 0 : i32
    %c0_i32_0 = arith.constant 0 : i32
    %c0_i32_1 = arith.constant 0 : i32
    return %c0_i32, %c0_i32_0 : i32, i32
  }
  func.func @transform_5(%arg0: i32) -> (i32, i32) {
    %c0_i32 = arith.constant 0 : i32
    %c0_i32_0 = arith.constant 0 : i32
    return %arg0, %c0_i32 : i32, i32
  }
}

</mosaic_0001>

<llo_original>
// kernel: tpu_custom_call.1
$region0: #{tpu_custom_call.1}
  #allocation0 [shape = 'u32[]', space=smem, size = 0x4, offset = 0x4, fixed_abs, tag = 'smem constant byte address 0x4 - core index']
  #allocation1 [shape = 'u32[144,128]{1,0:T(1,128)}', space=vmem, size = 0x12000, scoped, tag = 'internal scratch']
  %s0 = inlined_call_operand.vmem [shape: bf16[8,16], index: 0, kind: input, shape index: {}]
  %s1 = inlined_call_operand.vmem [shape: bf16[16,384], index: 1, kind: input, shape index: {}]
  %s2 = inlined_call_operand.hbm [shape: bf16[128,384], index: 2, kind: input, shape index: {}]
  %s3 = inlined_call_operand.vmem [shape: bf16[128,8], index: 3, kind: input, shape index: {}]
  %s4 = inlined_call_operand.vmem [shape: f32[8,384], index: 4, kind: input, shape index: {}]
  %s5 = inlined_call_operand.hbm [shape: f32[8,8], index: 5, kind: output, shape index: {}]
  %s6 = sld [smem:[#allocation0]]
  $region34: #{tpu_custom_call.1} parent=0
    _
  %s8 = ssub.s32 1, %s6
  %s9 = scalar_select 0, %s8, %s6
  $region1: #{tpu_custom_call.1} parent=0
    #allocation2 [shape = 'u8[98304]{0}', space=vmem, size = 0x18000, scoped, tag = 'input window, operand 2, single buffered']
    #allocation3 [shape = 's32[1]{0}', space=sflag, size = 0x4, scoped, tag = 'scoped memory for tpu_custom_call.1']
    #allocation4 [shape = 's32[1]{0}', space=sflag, size = 0x4, scoped, tag = 'scoped memory for tpu_custom_call.1']
    #allocation5 [shape = 'u8[4096]{0}', space=vmem, size = 0x1000, scoped, tag = 'output window, operand 0, single buffered']
    %10 = vsyncpa [#allocation3], 0
    %11 = vsyncpa [#allocation4], 0
    // Predicated region
    $region2: #{tpu_custom_call.1} parent=1 // pred_check
      _
    $region3: #{tpu_custom_call.1} parent=1 // pred_check_branch
      %13 = sbr.rel (0) target = $region5
    $region4: #{tpu_custom_call.1} parent=1 // pred_region
      _
    $region5: #{tpu_custom_call.1} parent=1 // pred_fallthru
      _
    // Predicated region
    $region6: #{tpu_custom_call.1} parent=1 // pred_check
      _
    $region7: #{tpu_custom_call.1} parent=1 // pred_check_branch
      %15 = sbr.rel (0) target = $region9
    $region8: #{tpu_custom_call.1} parent=1 // pred_region
      _
    $region9: #{tpu_custom_call.1} parent=1 // pred_fallthru
      _
    // Predicated region
    $region10: #{tpu_custom_call.1} parent=1 // pred_check
      _
    $region11: #{tpu_custom_call.1} parent=1 // pred_check_branch
      %17 = sbr.rel (0) target = $region13
    $region12: #{tpu_custom_call.1} parent=1 // pred_region
      %s19 = ssub.s32 3072, 3072
      %20 = vsyncadd [#allocation3], %s19
      %s21 = sshll.u32 [#allocation2], 4
      %s22 = int_to_ptr.vmem [resolvable:$true] %s21
      %27 = dma.hbm_to_vmem [thread:$0]  %s2, 3072, %s22, [#allocation3], 192, 192, 12
    $region13: #{tpu_custom_call.1} parent=1 // pred_fallthru
      _
    // Predicated region
    $region14: #{tpu_custom_call.1} parent=1 // pred_check
      _
    $region15: #{tpu_custom_call.1} parent=1 // pred_check_branch
      %29 = sbr.rel (0) target = $region17
    $region16: #{tpu_custom_call.1} parent=1 // pred_region
      _
    $region17: #{tpu_custom_call.1} parent=1 // pred_fallthru
      _
    // Predicated region
    $region18: #{tpu_custom_call.1} parent=1 // pred_check
      _
    $region19: #{tpu_custom_call.1} parent=1 // pred_check_branch
      %31 = sbr.rel (0) target = $region21
    $region20: #{tpu_custom_call.1} parent=1 // pred_region
      _
    $region21: #{tpu_custom_call.1} parent=1 // pred_fallthru
      _
    // Predicated region
    $region22: #{tpu_custom_call.1} parent=1 // pred_check
      _
    $region23: #{tpu_custom_call.1} parent=1 // pred_check_branch
      %33 = sbr.rel (0) target = $region25
    $region24: #{tpu_custom_call.1} parent=1 // pred_region
      %34 = dma.done [#allocation3], 3072
    $region25: #{tpu_custom_call.1} parent=1 // pred_fallthru
      _
    %v36 = vld [vmem:[%s0] sm:$0xf]
    %v37 = vld [vmem:[%s4] sm:$0xff]
    %v38 = vld [vmem:[%s4 + $0x8] sm:$0xff]
    %v39 = vld [vmem:[%s4 + $0x10] sm:$0xff]
    %v40 = vld [vmem:[%s1] sm:$0xff]
    %v41 = vld [vmem:[%s1 + $0x8] sm:$0xf]
    %v42 = vld [vmem:[%s1 + $0xc] sm:$0xff]
    %v43 = vld [vmem:[%s1 + $0x14] sm:$0xf]
    %v48 = vunpack.c.l.b16 %v40
    %v49 = vunpack.c.h.b16 %v40
    %v50 = vunpack.c.l.b16 %v41
    %v51 = vunpack.c.l.b16 %v42
    %v52 = vunpack.c.h.b16 %v42
    %v53 = vunpack.c.l.b16 %v43
    %v54 = vpack.c.b16 %v51, %v48
    %v55 = vpack.c.b16 %v52, %v49
    %v56 = vpack.c.b16 %v53, %v50
    %vm60 = vcmask 130048
    %v62 = vsel %vm60, %v36, 0
    %64 = vmatprep.subr.bf16.mxu0 %v55
    %65 = vmatpush1.bf16.msra.mxu0 %v54
    %66 = vmatprep.subr.bf16.mxu0 0
    %67 = vmatpush1.bf16.msra.mxu0 0
    %68 = vmatprep.subr.bf16.mxu0 0
    %69 = vmatpush1.bf16.msra.mxu0 0
    %70 = vmatprep.subr.bf16.mxu0 0
    %71 = vmatpush1.bf16.msra.mxu0 0
    %72 = vmatprep.subr.bf16.mxu0 0
    %73 = vmatpush1.bf16.msra.mxu0 0
    %74 = vmatprep.subr.bf16.mxu0 0
    %75 = vmatpush1.bf16.msra.mxu0 0
    %76 = vmatprep.subr.bf16.mxu0 0
    %77 = vmatpush1.bf16.msra.mxu0 0
    %78 = vmatprep.subr.bf16.mxu0 0
    %79 = vmatpush1.bf16.msra.mxu0 0
    %80 = vmatprep.subr.bf16.mxu0 0
    %81 = vmatpush1.bf16.msra.mxu0 0
    %82 = vmatprep.subr.bf16.mxu0 0
    %83 = vmatpush1.bf16.msra.mxu0 0
    %84 = vmatprep.subr.bf16.mxu0 0
    %85 = vmatpush1.bf16.msra.mxu0 0
    %86 = vmatprep.subr.bf16.mxu0 0
    %87 = vmatpush1.bf16.msra.mxu0 0
    %88 = vmatprep.subr.bf16.mxu0 0
    %89 = vmatpush1.bf16.msra.mxu0 0
    %90 = vmatprep.subr.bf16.mxu0 0
    %91 = vmatpush1.bf16.msra.mxu0 0
    %92 = vmatprep.subr.bf16.mxu0 0
    %93 = vmatpush1.bf16.msra.mxu0 0
    %94 = vmatprep.subr.bf16.mxu0 0
    %95 = vmatpush1.bf16.msra.mxu0 0
    %96 = vmatprep.mubr.bf16.mxu0 0
    %97 = vmatmul.mubr.bf16.gmra.mrb[0].mxu0 %v62
    %v98 = vpop.f32.mrb[0].mxu0
    %v99 = vadd.f32 0.0, %v98
    %v100 = vpop.f32.mrb[0].mxu0
    %v101 = vadd.f32 0.0, %v100
    %v102 = vpop.f32.mrb[0].mxu0
    %v103 = vpop.f32.mrb[0].mxu0
    %104 = vdwg.mxu0
    %105 = vmatprep.subr.bf16.mxu0 0
    %106 = vmatpush1.bf16.msra.mxu0 %v56
    %107 = vmatprep.subr.bf16.mxu0 0
    %108 = vmatpush1.bf16.msra.mxu0 0
    %109 = vmatprep.subr.bf16.mxu0 0
    %110 = vmatpush1.bf16.msra.mxu0 0
    %111 = vmatprep.subr.bf16.mxu0 0
    %112 = vmatpush1.bf16.msra.mxu0 0
    %113 = vmatprep.subr.bf16.mxu0 0
    %114 = vmatpush1.bf16.msra.mxu0 0
    %115 = vmatprep.subr.bf16.mxu0 0
    %116 = vmatpush1.bf16.msra.mxu0 0
    %117 = vmatprep.subr.bf16.mxu0 0
    %118 = vmatpush1.bf16.msra.mxu0 0
    %119 = vmatprep.subr.bf16.mxu0 0
    %120 = vmatpush1.bf16.msra.mxu0 0
    %121 = vmatprep.subr.bf16.mxu0 0
    %122 = vmatpush1.bf16.msra.mxu0 0
    %123 = vmatprep.subr.bf16.mxu0 0
    %124 = vmatpush1.bf16.msra.mxu0 0
    %125 = vmatprep.subr.bf16.mxu0 0
    %126 = vmatpush1.bf16.msra.mxu0 0
    %127 = vmatprep.subr.bf16.mxu0 0
    %128 = vmatpush1.bf16.msra.mxu0 0
    %129 = vmatprep.subr.bf16.mxu0 0
    %130 = vmatpush1.bf16.msra.mxu0 0
    %131 = vmatprep.subr.bf16.mxu0 0
    %132 = vmatpush1.bf16.msra.mxu0 0
    %133 = vmatprep.subr.bf16.mxu0 0
    %134 = vmatpush1.bf16.msra.mxu0 0
    %135 = vmatprep.subr.bf16.mxu0 0
    %136 = vmatpush1.bf16.msra.mxu0 0
    %137 = vmatprep.mubr.bf16.mxu0 0
    %138 = vmatmul.mubr.bf16.gmra.mrb[0].mxu0 %v62
    %v139 = vpop.f32.mrb[0].mxu0
    %v140 = vadd.f32 0.0, %v139
    %v141 = vpop.f32.mrb[0].mxu0
    %v142 = vpop.f32.mrb[0].mxu0
    %v143 = vpop.f32.mrb[0].mxu0
    %144 = vdwg.mxu0
    %v145 = vxor.u32 %v99, 2147483648
    %v146 = vmul.f32 %v145, 1.442695
    %v147 = vpow.pop %v146
    %v148 = vadd.f32 %v147, 1.0
    %v149 = vrcp.pop %v148
    %v150 = vmul.f32 1.0, %v149
    %v151 = vxor.u32 %v101, 2147483648
    %v152 = vmul.f32 %v151, 1.442695
    %v153 = vpow.pop %v152
    %v154 = vadd.f32 %v153, 1.0
    %v155 = vrcp.pop %v154
    %v156 = vmul.f32 1.0, %v155
    %v157 = vlaneseq
    %v158 = vshrl.u32 %v157, 7
    %v159 = vsub.s32 0, %v158
    %v160 = vrot.slane %v37, %v159
    %v161 = vmul.f32 %v150, %v160
    %v162 = vadd.f32 %v140, %v161
    %v163 = vtanh.pop %v162
    %v164 = vsub.f32 1.0, %v156
    %v165 = vmul.f32 %v164, %v163
    %v166 = vpack.c.bf16 %v165, %v165
    %v167 = vld [vmem:[#allocation2] sm:$0xff]
    %v168 = vld [vmem:[#allocation2 + $0x8] sm:$0xf]
    %v169 = vld [vmem:[#allocation2 + $0xc] sm:$0xff]
    %v170 = vld [vmem:[#allocation2 + $0x14] sm:$0xf]
    %v171 = vld [vmem:[#allocation2 + $0x18] sm:$0xff]
    %v172 = vld [vmem:[#allocation2 + $0x20] sm:$0xf]
    %v173 = vld [vmem:[#allocation2 + $0x24] sm:$0xff]
    %v174 = vld [vmem:[#allocation2 + $0x2c] sm:$0xf]
    %v175 = vld [vmem:[#allocation2 + $0x30] sm:$0xff]
    %v176 = vld [vmem:[#allocation2 + $0x38] sm:$0xf]
    %v177 = vld [vmem:[#allocation2 + $0x3c] sm:$0xff]
    %v178 = vld [vmem:[#allocation2 + $0x44] sm:$0xf]
    %v179 = vld [vmem:[#allocation2 + $0x48] sm:$0xff]
    %v180 = vld [vmem:[#allocation2 + $0x50] sm:$0xf]
    %v181 = vld [vmem:[#allocation2 + $0x54] sm:$0xff]
    %v182 = vld [vmem:[#allocation2 + $0x5c] sm:$0xf]
    %v183 = vld [vmem:[#allocation2 + $0x60] sm:$0xff]
    %v184 = vld [vmem:[#allocation2 + $0x68] sm:$0xf]
    %v185 = vld [vmem:[#allocation2 + $0x6c] sm:$0xff]
    %v186 = vld [vmem:[#allocation2 + $0x74] sm:$0xf]
    %v187 = vld [vmem:[#allocation2 + $0x78] sm:$0xff]
    %v188 = vld [vmem:[#allocation2 + $0x80] sm:$0xf]
    %v189 = vld [vmem:[#allocation2 + $0x84] sm:$0xff]
    %v190 = vld [vmem:[#allocation2 + $0x8c] sm:$0xf]
    %v191 = vld [vmem:[#allocation2 + $0x90] sm:$0xff]
    %v192 = vld [vmem:[#allocation2 + $0x98] sm:$0xf]
    %v193 = vld [vmem:[#allocation2 + $0x9c] sm:$0xff]
    %v194 = vld [vmem:[#allocation2 + $0xa4] sm:$0xf]
    %v195 = vld [vmem:[#allocation2 + $0xa8] sm:$0xff]
    %v196 = vld [vmem:[#allocation2 + $0xb0] sm:$0xf]
    %v197 = vld [vmem:[#allocation2 + $0xb4] sm:$0xff]
    %v198 = vld [vmem:[#allocation2 + $0xbc] sm:$0xf]
    %v199 = vlaneseq
    %v200 = vshrl.u32 %v199, 7
    %v201 = vsub.s32 1, %v200
    %v202 = vrot.slane %v37, %v201
    %v203 = vlaneseq
    %v204 = vshrl.u32 %v203, 7
    %v205 = vsub.s32 1, %v204
    %v206 = vrot.slane %v38, %v205
    %v207 = vlaneseq
    %v208 = vshrl.u32 %v207, 7
    %v209 = vsub.s32 1, %v208
    %v210 = vrot.slane %v39, %v209
    %v243 = vunpack.c.l.b16 %v167
    %v244 = vunpack.c.h.b16 %v167
    %v245 = vunpack.c.l.b16 %v168
    %v246 = vunpack.c.l.b16 %v169
    %v247 = vunpack.c.h.b16 %v169
    %v248 = vunpack.c.l.b16 %v170
    %v249 = vunpack.c.l.b16 %v171
    %v250 = vunpack.c.h.b16 %v171
    %v251 = vunpack.c.l.b16 %v172
    %v252 = vunpack.c.l.b16 %v173
    %v253 = vunpack.c.h.b16 %v173
    %v254 = vunpack.c.l.b16 %v174
    %v255 = vunpack.c.l.b16 %v175
    %v256 = vunpack.c.h.b16 %v175
    %v257 = vunpack.c.l.b16 %v176
    %v258 = vunpack.c.l.b16 %v177
    %v259 = vunpack.c.h.b16 %v177
    %v260 = vunpack.c.l.b16 %v178
    %v261 = vunpack.c.l.b16 %v179
    %v262 = vunpack.c.h.b16 %v179
    %v263 = vunpack.c.l.b16 %v180
    %v264 = vunpack.c.l.b16 %v181
    %v265 = vunpack.c.h.b16 %v181
    %v266 = vunpack.c.l.b16 %v182
    %v267 = vunpack.c.l.b16 %v183
    %v268 = vunpack.c.h.b16 %v183
    %v269 = vunpack.c.l.b16 %v184
    %v270 = vunpack.c.l.b16 %v185
    %v271 = vunpack.c.h.b16 %v185
    %v272 = vunpack.c.l.b16 %v186
    %v273 = vunpack.c.l.b16 %v187
    %v274 = vunpack.c.h.b16 %v187
    %v275 = vunpack.c.l.b16 %v188
    %v276 = vunpack.c.l.b16 %v189
    %v277 = vunpack.c.h.b16 %v189
    %v278 = vunpack.c.l.b16 %v190
    %v279 = vunpack.c.l.b16 %v191
    %v280 = vunpack.c.h.b16 %v191
    %v281 = vunpack.c.l.b16 %v192
    %v282 = vunpack.c.l.b16 %v193
    %v283 = vunpack.c.h.b16 %v193
    %v284 = vunpack.c.l.b16 %v194
    %v285 = vunpack.c.l.b16 %v195
    %v286 = vunpack.c.h.b16 %v195
    %v287 = vunpack.c.l.b16 %v196
    %v288 = vunpack.c.l.b16 %v197
    %v289 = vunpack.c.h.b16 %v197
    %v290 = vunpack.c.l.b16 %v198
    %v291 = vpack.c.b16 %v246, %v243
    %v292 = vpack.c.b16 %v247, %v244
    %v293 = vpack.c.b16 %v248, %v245
    %v294 = vpack.c.b16 %v252, %v249
    %v295 = vpack.c.b16 %v253, %v250
    %v296 = vpack.c.b16 %v254, %v251
    %v297 = vpack.c.b16 %v258, %v255
    %v298 = vpack.c.b16 %v259, %v256
    %v299 = vpack.c.b16 %v260, %v257
    %v300 = vpack.c.b16 %v264, %v261
    %v301 = vpack.c.b16 %v265, %v262
    %v302 = vpack.c.b16 %v266, %v263
    %v303 = vpack.c.b16 %v270, %v267
    %v304 = vpack.c.b16 %v271, %v268
    %v305 = vpack.c.b16 %v272, %v269
    %v306 = vpack.c.b16 %v276, %v273
    %v307 = vpack.c.b16 %v277, %v274
    %v308 = vpack.c.b16 %v278, %v275
    %v309 = vpack.c.b16 %v282, %v279
    %v310 = vpack.c.b16 %v283, %v280
    %v311 = vpack.c.b16 %v284, %v281
    %v312 = vpack.c.b16 %v288, %v285
    %v313 = vpack.c.b16 %v289, %v286
    %v314 = vpack.c.b16 %v290, %v287
    %339 = vmatprep.subr.bf16.mxu0 %v292
    %340 = vmatpush1.bf16.msra.mxu0 %v291
    %341 = vmatprep.subr.bf16.mxu0 %v295
    %342 = vmatpush1.bf16.msra.mxu0 %v294
    %343 = vmatprep.subr.bf16.mxu0 %v298
    %344 = vmatpush1.bf16.msra.mxu0 %v297
    %345 = vmatprep.subr.bf16.mxu0 %v301
    %346 = vmatpush1.bf16.msra.mxu0 %v300
    %347 = vmatprep.subr.bf16.mxu0 %v304
    %348 = vmatpush1.bf16.msra.mxu0 %v303
    %349 = vmatprep.subr.bf16.mxu0 %v307
    %350 = vmatpush1.bf16.msra.mxu0 %v306
    %351 = vmatprep.subr.bf16.mxu0 %v310
    %352 = vmatpush1.bf16.msra.mxu0 %v309
    %353 = vmatprep.subr.bf16.mxu0 %v313
    %354 = vmatpush1.bf16.msra.mxu0 %v312
    %355 = vmatprep.subr.bf16.mxu0 0
    %356 = vmatpush1.bf16.msra.mxu0 0
    %357 = vmatprep.subr.bf16.mxu0 0
    %358 = vmatpush1.bf16.msra.mxu0 0
    %359 = vmatprep.subr.bf16.mxu0 0
    %360 = vmatpush1.bf16.msra.mxu0 0
    %361 = vmatprep.subr.bf16.mxu0 0
    %362 = vmatpush1.bf16.msra.mxu0 0
    %363 = vmatprep.subr.bf16.mxu0 0
    %364 = vmatpush1.bf16.msra.mxu0 0
    %365 = vmatprep.subr.bf16.mxu0 0
    %366 = vmatpush1.bf16.msra.mxu0 0
    %367 = vmatprep.subr.bf16.mxu0 0
    %368 = vmatpush1.bf16.msra.mxu0 0
    %369 = vmatprep.subr.bf16.mxu0 0
    %370 = vmatpush1.bf16.msra.mxu0 0
    %371 = vmatprep.mubr.bf16.mxu0 0
    %372 = vmatmul.mubr.bf16.gmra.mrb[0].mxu0 %v166
    %v373 = vpop.f32.mrb[0].mxu0
    %v374 = vadd.f32 %v202, %v373
    %v375 = vpop.f32.mrb[0].mxu0
    %v376 = vadd.f32 %v206, %v375
    %v377 = vpop.f32.mrb[0].mxu0
    %v378 = vpop.f32.mrb[0].mxu0
    %379 = vdwg.mxu0
    %380 = vmatprep.subr.bf16.mxu0 0
    %381 = vmatpush1.bf16.msra.mxu0 %v293
    %382 = vmatprep.subr.bf16.mxu0 0
    %383 = vmatpush1.bf16.msra.mxu0 %v296
    %384 = vmatprep.subr.bf16.mxu0 0
    %385 = vmatpush1.bf16.msra.mxu0 %v299
    %386 = vmatprep.subr.bf16.mxu0 0
    %387 = vmatpush1.bf16.msra.mxu0 %v302
    %388 = vmatprep.subr.bf16.mxu0 0
    %389 = vmatpush1.bf16.msra.mxu0 %v305
    %390 = vmatprep.subr.bf16.mxu0 0
    %391 = vmatpush1.bf16.msra.mxu0 %v308
    %392 = vmatprep.subr.bf16.mxu0 0
    %393 = vmatpush1.bf16.msra.mxu0 %v311
    %394 = vmatprep.subr.bf16.mxu0 0
    %395 = vmatpush1.bf16.msra.mxu0 %v314
    %396 = vmatprep.subr.bf16.mxu0 0
    %397 = vmatpush1.bf16.msra.mxu0 0
    %398 = vmatprep.subr.bf16.mxu0 0
    %399 = vmatpush1.bf16.msra.mxu0 0
    %400 = vmatprep.subr.bf16.mxu0 0
    %401 = vmatpush1.bf16.msra.mxu0 0
    %402 = vmatprep.subr.bf16.mxu0 0
    %403 = vmatpush1.bf16.msra.mxu0 0
    %404 = vmatprep.subr.bf16.mxu0 0
    %405 = vmatpush1.bf16.msra.mxu0 0
    %406 = vmatprep.subr.bf16.mxu0 0
    %407 = vmatpush1.bf16.msra.mxu0 0
    %408 = vmatprep.subr.bf16.mxu0 0
    %409 = vmatpush1.bf16.msra.mxu0 0
    %410 = vmatprep.subr.bf16.mxu0 0
    %411 = vmatpush1.bf16.msra.mxu0 0
    %412 = vmatprep.mubr.bf16.mxu0 0
    %413 = vmatmul.mubr.bf16.gmra.mrb[0].mxu0 %v166
    %v414 = vpop.f32.mrb[0].mxu0
    %v415 = vadd.f32 %v210, %v414
    %v416 = vpop.f32.mrb[0].mxu0
    %v417 = vpop.f32.mrb[0].mxu0
    %v418 = vpop.f32.mrb[0].mxu0
    %419 = vdwg.mxu0
    %v420 = vxor.u32 %v374, 2147483648
    %v421 = vmul.f32 %v420, 1.442695
    %v422 = vpow.pop %v421
    %v423 = vadd.f32 %v422, 1.0
    %v424 = vrcp.pop %v423
    %v425 = vmul.f32 1.0, %v424
    %v426 = vxor.u32 %v376, 2147483648
    %v427 = vmul.f32 %v426, 1.442695
    %v428 = vpow.pop %v427
    %v429 = vadd.f32 %v428, 1.0
    %v430 = vrcp.pop %v429
    %v431 = vmul.f32 1.0, %v430
    %v432 = vlaneseq
    %v433 = vshrl.u32 %v432, 7
    %v434 = vsub.s32 2, %v433
    %v435 = vrot.slane %v37, %v434
    %v436 = vmul.f32 %v425, %v435
    %v437 = vadd.f32 %v415, %v436
    %v438 = vtanh.pop %v437
    %v439 = vsub.f32 1.0, %v431
    %v440 = vmul.f32 %v439, %v438
    %v441 = vpack.c.bf16 %v440, %v440
    %v442 = vld [vmem:[%s3] sm:$0xf]
    %v443 = vld [vmem:[%s3 + $0x4] sm:$0xf]
    %v444 = vld [vmem:[%s3 + $0x8] sm:$0xf]
    %v445 = vld [vmem:[%s3 + $0xc] sm:$0xf]
    %v446 = vld [vmem:[%s3 + $0x10] sm:$0xf]
    %v447 = vld [vmem:[%s3 + $0x14] sm:$0xf]
    %v448 = vld [vmem:[%s3 + $0x18] sm:$0xf]
    %v449 = vld [vmem:[%s3 + $0x1c] sm:$0xf]
    %v450 = vld [vmem:[%s3 + $0x20] sm:$0xf]
    %v451 = vld [vmem:[%s3 + $0x24] sm:$0xf]
    %v452 = vld [vmem:[%s3 + $0x28] sm:$0xf]
    %v453 = vld [vmem:[%s3 + $0x2c] sm:$0xf]
    %v454 = vld [vmem:[%s3 + $0x30] sm:$0xf]
    %v455 = vld [vmem:[%s3 + $0x34] sm:$0xf]
    %v456 = vld [vmem:[%s3 + $0x38] sm:$0xf]
    %v457 = vld [vmem:[%s3 + $0x3c] sm:$0xf]
    %v458 = vlaneseq
    %v459 = vshrl.u32 %v458, 7
    %v460 = vsub.s32 3, %v459
    %v461 = vrot.slane %v37, %v460
    %v478 = vunpack.c.l.b16 %v442
    %v479 = vunpack.c.l.b16 %v443
    %v480 = vunpack.c.l.b16 %v444
    %v481 = vunpack.c.l.b16 %v445
    %v482 = vunpack.c.l.b16 %v446
    %v483 = vunpack.c.l.b16 %v447
    %v484 = vunpack.c.l.b16 %v448
    %v485 = vunpack.c.l.b16 %v449
    %v486 = vunpack.c.l.b16 %v450
    %v487 = vunpack.c.l.b16 %v451
    %v488 = vunpack.c.l.b16 %v452
    %v489 = vunpack.c.l.b16 %v453
    %v490 = vunpack.c.l.b16 %v454
    %v491 = vunpack.c.l.b16 %v455
    %v492 = vunpack.c.l.b16 %v456
    %v493 = vunpack.c.l.b16 %v457
    %v494 = vpack.c.b16 %v479, %v478
    %v495 = vpack.c.b16 %v481, %v480
    %v496 = vpack.c.b16 %v483, %v482
    %v497 = vpack.c.b16 %v485, %v484
    %v498 = vpack.c.b16 %v487, %v486
    %v499 = vpack.c.b16 %v489, %v488
    %v500 = vpack.c.b16 %v491, %v490
    %v501 = vpack.c.b16 %v493, %v492
    %510 = vmatprep.subr.bf16.mxu0 0
    %511 = vmatpush1.bf16.msra.mxu0 %v494
    %512 = vmatprep.subr.bf16.mxu0 0
    %513 = vmatpush1.bf16.msra.mxu0 %v495
    %514 = vmatprep.subr.bf16.mxu0 0
    %515 = vmatpush1.bf16.msra.mxu0 %v496
    %516 = vmatprep.subr.bf16.mxu0 0
    %517 = vmatpush1.bf16.msra.mxu0 %v497
    %518 = vmatprep.subr.bf16.mxu0 0
    %519 = vmatpush1.bf16.msra.mxu0 %v498
    %520 = vmatprep.subr.bf16.mxu0 0
    %521 = vmatpush1.bf16.msra.mxu0 %v499
    %522 = vmatprep.subr.bf16.mxu0 0
    %523 = vmatpush1.bf16.msra.mxu0 %v500
    %524 = vmatprep.subr.bf16.mxu0 0
    %525 = vmatpush1.bf16.msra.mxu0 %v501
    %526 = vmatprep.subr.bf16.mxu0 0
    %527 = vmatpush1.bf16.msra.mxu0 0
    %528 = vmatprep.subr.bf16.mxu0 0
    %529 = vmatpush1.bf16.msra.mxu0 0
    %530 = vmatprep.subr.bf16.mxu0 0
    %531 = vmatpush1.bf16.msra.mxu0 0
    %532 = vmatprep.subr.bf16.mxu0 0
    %533 = vmatpush1.bf16.msra.mxu0 0
    %534 = vmatprep.subr.bf16.mxu0 0
    %535 = vmatpush1.bf16.msra.mxu0 0
    %536 = vmatprep.subr.bf16.mxu0 0
    %537 = vmatpush1.bf16.msra.mxu0 0
    %538 = vmatprep.subr.bf16.mxu0 0
    %539 = vmatpush1.bf16.msra.mxu0 0
    %540 = vmatprep.subr.bf16.mxu0 0
    %541 = vmatpush1.bf16.msra.mxu0 0
    %542 = vmatprep.mubr.bf16.mxu0 0
    %543 = vmatmul.mubr.bf16.gmra.mrb[0].mxu0 %v441
    %v544 = vpop.f32.mrb[0].mxu0
    %v545 = vadd.f32 %v461, %v544
    %v546 = vpop.f32.mrb[0].mxu0
    %v547 = vpop.f32.mrb[0].mxu0
    %v548 = vpop.f32.mrb[0].mxu0
    %549 = vdwg.mxu0
    %vm550 = vcmask 64512
    %551 = vst.msk [vmem:[#allocation5] sm:$0xff] %vm550, %v545
    // Predicated region
    $region26: #{tpu_custom_call.1} parent=1 // pred_check
      _
    $region27: #{tpu_custom_call.1} parent=1 // pred_check_branch
      %553 = sbr.rel (0) target = $region29
    $region28: #{tpu_custom_call.1} parent=1 // pred_region
      %s555 = ssub.s32 128, 128
      %556 = vsyncadd [#allocation4], %s555
      %s558 = sshll.u32 [#allocation5], 4
      %s559 = int_to_ptr.vmem [resolvable:$true] %s558
      %561 = dma.vmem_to_hbm [thread:$0]  %s559, 128, %s5, [#allocation4]
    $region29: #{tpu_custom_call.1} parent=1 // pred_fallthru
      _
    // Predicated region
    $region30: #{tpu_custom_call.1} parent=1 // pred_check
      _
    $region31: #{tpu_custom_call.1} parent=1 // pred_check_branch
      %563 = sbr.rel (0) target = $region33
    $region32: #{tpu_custom_call.1} parent=1 // pred_region
      %564 = dma.done [#allocation4], 128
    $region33: #{tpu_custom_call.1} parent=1 // pred_fallthru
      _
    %565 = vsyncpa [#allocation3], 1
    %566 = vsyncpa [#allocation4], 1

</llo_original>
